<compile_context>
chip_gen: v7x
topology: tpu7x:2x2x1
jax: 0.10.0
libtpu: 0.0.40
codegen_flags: <defaults>
</compile_context>

<pallas_src>
import jax
import jax.numpy as jnp
from jax.experimental import pallas as pl
from jax.experimental.pallas import tpu as pltpu


def _round_up(x, m):
    return ((x + m - 1) // m) * m


def _tensorcores_per_chip():
    """Best-effort TC-per-chip sniff (v7x has 2); fall back to 1 on any failure."""
    try:
        kind = jax.devices()[0].device_kind.lower()
        return 2 if "v7" in kind else 1
    except Exception:
        return 1


def _policy_kernel(x_ref, w1_ref, b1_ref, w2_ref, b2_ref, w3_ref, b3_ref, o_ref):
    """Whole MLP hot path in VMEM for one batch tile.

    x_ref : (tb, S)          input states tile (f32 or bf16)
    w1/b1 : (S, H1), (1, H1)       (w* may be bf16; b* are f32)
    w2/b2 : (H1, H2), (1, H2)
    w3/b3 : (H2, A), (1, A)        <- already sliced to the "means" half
    o_ref : (tb, A)          tanh(means), f32
    """
    cdtype = w1_ref.dtype  # matmul operand dtype (f32 or bf16); accumulation is f32.

    x = x_ref[...].astype(cdtype)
    h1 = jnp.dot(x, w1_ref[...], preferred_element_type=jnp.float32) + b1_ref[...]
    h1 = jnp.maximum(h1, 0.0)                                    # ReLU (f32, VPU)
    h2 = jnp.dot(h1.astype(cdtype), w2_ref[...],
                 preferred_element_type=jnp.float32) + b2_ref[...]
    h2 = jnp.maximum(h2, 0.0)                                    # ReLU (f32, VPU)
    out = jnp.dot(h2.astype(cdtype), w3_ref[...],
                  preferred_element_type=jnp.float32) + b3_ref[...]
    # w3/b3 are pre-sliced to A columns, so this is already chunk(2, dim=-1)[0].
    o_ref[...] = jnp.tanh(out).astype(o_ref.dtype)


def state_dependent_policy_forward(states, params, *, tile_b=None, use_bf16=True,
                                    max_tile_b=1024):
    """Forward pass: tanh of the mean head of the MLP.

    states    : (B, S) float32
    params    : dict of w1,b1,w2,b2,w3,b3 with w_i stored as [in, out]
    tile_b    : batch tile (rows per grid step). Default: ceil-split of B into the fewest
                tiles of at most `max_tile_b` rows (bounded padding waste), with >= 2 grid
                steps on 2-TensorCore chips when B is large enough to amortize the split.
    use_bf16  : cast matmul operands (weights + activations) to bf16 (MXU-native on
                v5e/v6e/v7x); accumulation stays f32.  Set False for bit-tight f32.
    max_tile_b: cap on rows per grid step (VMEM at 1024 rows f32 is ~3-4 MB).
    """
    B, S = states.shape
    w1, b1 = params["w1"], params["b1"]
    w2, b2 = params["w2"], params["b2"]
    w3, b3 = params["w3"], params["b3"]
    H1 = w1.shape[1]
    H2 = w2.shape[1]
    A = w3.shape[1] // 2

    # Pre-slice layer 3 to the "means" half: halves matmul-3 work, no in-kernel lane slice.
    w3m = w3[:, :A]
    b3m = b3[:, :A]

    if use_bf16:
        # bf16 MXU operands; biases + accumulation + elementwise stay f32.
        # (Both operands must be bf16 for the fast MXU path; casting only the weights
        #  would promote back to an f32 matmul.)
        states_c = states.astype(jnp.bfloat16)
        w1c, w2c, w3c = (w.astype(jnp.bfloat16) for w in (w1, w2, w3m))
    else:
        states_c = states
        w1c, w2c, w3c = w1, w2, w3m

    # --- Batch tiling -----------------------------------------------------------------
    if tile_b is None:
        n_steps = pl.cdiv(B, max_tile_b)            # fewest tiles of <= max_tile_b rows
        if _tensorcores_per_chip() >= 2 and B >= 512:
            n_steps = max(n_steps, 2)               # keep both v7x TensorCores busy
        tile_b = _round_up(pl.cdiv(B, n_steps), 8)  # at most one partial tile of padding
    tile_b = max(8, _round_up(tile_b, 8))
    Bp = _round_up(B, tile_b)
    if Bp != B:
        states_c = jnp.pad(states_c, ((0, Bp - B), (0, 0)))

    grid = (Bp // tile_b,)

    # TODO(synk): if profiling ever shows the A=4-lane masked output stores exposed at very
    # large B, zero-pad w3m/b3m to 128 output columns (lane-dense vst) and slice in the
    # wrapper; likewise S=32 could be padded to 128 lanes for layer-1 loads.  Both are
    # negligible at these sizes.  An fp8 w2 path is a further v7x-only option.

    def _call(weight_pipeline_mode):
        def wspec(shape):
            if weight_pipeline_mode is None:
                return pl.BlockSpec(shape, lambda i: (0, 0))
            return pl.BlockSpec(shape, lambda i: (0, 0),
                                pipeline_mode=weight_pipeline_mode)

        return pl.pallas_call(
            _policy_kernel,
            out_shape=jax.ShapeDtypeStruct((Bp, A), jnp.float32),
            grid_spec=pltpu.PrefetchScalarGridSpec(
                num_scalar_prefetch=0,
                grid=grid,
                in_specs=[
                    pl.BlockSpec((tile_b, S), lambda i: (i, 0)),   # states tile
                    wspec((S, H1)),
                    wspec((1, H1)),
                    wspec((H1, H2)),
                    wspec((1, H2)),
                    wspec((H2, A)),
                    wspec((1, A)),
                ],
                out_specs=pl.BlockSpec((tile_b, A), lambda i: (i, 0)),
            ),
            compiler_params=pltpu.CompilerParams(
                dimension_semantics=("parallel",),
                vmem_limit_bytes=32 * 1024 * 1024,  # headroom vs. v5e's 16 MiB default
            ),
        )(states_c, w1c, b1, w2c, b2, w3c, b3m)

    try:
        # Constant-index_map operands: single VMEM buffer (no pointless double buffer).
        out = _call(pl.Buffered(1))
    except Exception:
        # Fallback for JAX builds where pipeline_mode=Buffered(1) is unsupported.
        out = _call(None)

    return out[:B] if Bp != B else out


def init_params(key, state_dim, action_dim, hidden_units=(256, 256)):
    """Deterministic synthetic parameter init (shapes match the PyTorch module)."""
    k1, k2, k3 = jax.random.split(key, 3)
    h1, h2 = hidden_units
    two_a = 2 * action_dim

    def lin(k, fan_in, fan_out):
        # simple scaled-normal init; stored as [in, out] for x @ W + b
        w = (jax.random.normal(k, (fan_in, fan_out), jnp.float32)
             / jnp.sqrt(jnp.float32(fan_in)))
        b = jnp.zeros((1, fan_out), jnp.float32)
        return w, b

    w1, b1 = lin(k1, state_dim, h1)
    w2, b2 = lin(k2, h1, h2)
    w3, b3 = lin(k3, h2, two_a)
    return {"w1": w1, "b1": b1, "w2": w2, "b2": b2, "w3": w3, "b3": b3}


def _reference_forward(states, params):
    """Pure-JAX reference of the PyTorch forward for a correctness check."""
    h1 = jnp.maximum(states @ params["w1"] + params["b1"], 0.0)
    h2 = jnp.maximum(h1 @ params["w2"] + params["b2"], 0.0)
    out = h2 @ params["w3"] + params["b3"]
    a = out.shape[-1] // 2
    return jnp.tanh(out[:, :a])


if __name__ == "__main__":
    key = jax.random.PRNGKey(0)
    k_params, k_states, k_big = jax.random.split(key, 3)

    batch = 16
    state_dim = 32      # state_shape = (32,)
    action_dim = 4      # action_shape = (4,)

    params = init_params(k_params, state_dim, action_dim, hidden_units=(256, 256))
    states = jax.random.normal(k_states, (batch, state_dim), jnp.float32)
    ref = _reference_forward(states, params)

    # 1) Default path: bf16 MXU operands, auto tile -> grid=(1,) for this small batch.
    out_bf16 = jax.block_until_ready(state_dependent_policy_forward(states, params))
    assert out_bf16.shape == (batch, action_dim)
    assert jnp.allclose(out_bf16, ref, atol=3e-2, rtol=0.0), "bf16 kernel mismatch vs reference"

    # 2) f32 operands, tight tolerance.
    out_f32 = jax.block_until_ready(
        state_dependent_policy_forward(states, params, use_bf16=False))
    assert out_f32.shape == (batch, action_dim)
    assert jnp.allclose(out_f32, ref, atol=1e-5, rtol=1e-5), "f32 kernel mismatch vs reference"

    # 3) Oversized explicit tile to exercise the batch-padding path.
    out_pad = jax.block_until_ready(
        state_dependent_policy_forward(states, params, tile_b=128, use_bf16=False))
    assert out_pad.shape == (batch, action_dim)
    assert jnp.allclose(out_pad, ref, atol=1e-5, rtol=1e-5), "padded kernel mismatch vs reference"

    # 4) Multi-step grid with bounded padding (B=300, max tile 128 -> 3 tiles of 104 rows).
    states_big = jax.random.normal(k_big, (300, state_dim), jnp.float32)
    ref_big = _reference_forward(states_big, params)
    out_big = jax.block_until_ready(
        state_dependent_policy_forward(states_big, params, use_bf16=False, max_tile_b=128))
    assert out_big.shape == (300, action_dim)
    assert jnp.allclose(out_big, ref_big, atol=1e-5, rtol=1e-5), "tiled kernel mismatch vs reference"

    print("KERNEL_OK")
</pallas_src>

<mosaic_0001>
module attributes {stable_mosaic.version = 11 : i64} {
  func.func @_policy_kernel(%arg0: i32, %arg1: memref<16x32xbf16, #tpu.memory_space<vmem>>, %arg2: memref<32x256xbf16, #tpu.memory_space<vmem>>, %arg3: memref<1x256xf32, #tpu.memory_space<vmem>>, %arg4: memref<256x256xbf16, #tpu.memory_space<vmem>>, %arg5: memref<1x256xf32, #tpu.memory_space<vmem>>, %arg6: memref<256x4xbf16, #tpu.memory_space<vmem>>, %arg7: memref<1x4xf32, #tpu.memory_space<vmem>>, %arg8: memref<16x4xf32, #tpu.memory_space<vmem>>) attributes {dimension_semantics = [#tpu.dimension_semantics<parallel>], iteration_bounds = array<i64: 1>, scalar_prefetch = 0 : i64, scratch_operands = 0 : i64, tpu.core_type = #tpu.core_type<tc>, window_params = [{transform_indices = @transform_0, window_bounds = array<i64: 16, 32>}, {pipeline_mode = #tpu.pipeline_mode<synchronous>, transform_indices = @transform_1, window_bounds = array<i64: 32, 256>}, {pipeline_mode = #tpu.pipeline_mode<synchronous>, transform_indices = @transform_2, window_bounds = array<i64: 1, 256>}, {pipeline_mode = #tpu.pipeline_mode<synchronous>, transform_indices = @transform_3, window_bounds = array<i64: 256, 256>}, {pipeline_mode = #tpu.pipeline_mode<synchronous>, transform_indices = @transform_4, window_bounds = array<i64: 1, 256>}, {pipeline_mode = #tpu.pipeline_mode<synchronous>, transform_indices = @transform_5, window_bounds = array<i64: 256, 4>}, {pipeline_mode = #tpu.pipeline_mode<synchronous>, transform_indices = @transform_6, window_bounds = array<i64: 1, 4>}, {transform_indices = @transform_7, window_bounds = array<i64: 16, 4>}]} {
    %c0 = arith.constant 0 : index
    %c0_0 = arith.constant 0 : index
    %0 = vector.load %arg1[%c0, %c0_0] : memref<16x32xbf16, #tpu.memory_space<vmem>>, vector<16x32xbf16>
    %c0_1 = arith.constant 0 : index
    %c0_2 = arith.constant 0 : index
    %1 = vector.load %arg2[%c0_1, %c0_2] : memref<32x256xbf16, #tpu.memory_space<vmem>>, vector<32x256xbf16>
    %cst = arith.constant dense<0.000000e+00> : vector<16x256xf32>
    %2 = tpu.matmul %0, %1, %cst {dimension_numbers = #tpu.dot_dimension_numbers<[1], [0], [0], [1], [0, 0, 1, 1], [], []>} : vector<16x32xbf16>, vector<32x256xbf16>, vector<16x256xf32> -> vector<16x256xf32>
    %c0_3 = arith.constant 0 : index
    %c0_4 = arith.constant 0 : index
    %3 = vector.load %arg3[%c0_3, %c0_4] : memref<1x256xf32, #tpu.memory_space<vmem>>, vector<1x256xf32>
    %4 = vector.broadcast %3 : vector<1x256xf32> to vector<16x256xf32>
    %5 = arith.addf %2, %4 : vector<16x256xf32>
    %cst_5 = arith.constant 0.000000e+00 : f32
    %6 = vector.broadcast %cst_5 : f32 to vector<16x256xf32>
    %7 = arith.maximumf %5, %6 : vector<16x256xf32>
    %8 = arith.truncf %7 : vector<16x256xf32> to vector<16x256xbf16>
    %c0_6 = arith.constant 0 : index
    %c0_7 = arith.constant 0 : index
    %9 = vector.load %arg4[%c0_6, %c0_7] : memref<256x256xbf16, #tpu.memory_space<vmem>>, vector<256x256xbf16>
    %cst_8 = arith.constant dense<0.000000e+00> : vector<16x256xf32>
    %10 = tpu.matmul %8, %9, %cst_8 {dimension_numbers = #tpu.dot_dimension_numbers<[1], [0], [0], [1], [0, 0, 1, 1], [], []>} : vector<16x256xbf16>, vector<256x256xbf16>, vector<16x256xf32> -> vector<16x256xf32>
    %c0_9 = arith.constant 0 : index
    %c0_10 = arith.constant 0 : index
    %11 = vector.load %arg5[%c0_9, %c0_10] : memref<1x256xf32, #tpu.memory_space<vmem>>, vector<1x256xf32>
    %12 = vector.broadcast %11 : vector<1x256xf32> to vector<16x256xf32>
    %13 = arith.addf %10, %12 : vector<16x256xf32>
    %cst_11 = arith.constant 0.000000e+00 : f32
    %14 = vector.broadcast %cst_11 : f32 to vector<16x256xf32>
    %15 = arith.maximumf %13, %14 : vector<16x256xf32>
    %16 = arith.truncf %15 : vector<16x256xf32> to vector<16x256xbf16>
    %c0_12 = arith.constant 0 : index
    %c0_13 = arith.constant 0 : index
    %17 = vector.load %arg6[%c0_12, %c0_13] : memref<256x4xbf16, #tpu.memory_space<vmem>>, vector<256x4xbf16>
    %cst_14 = arith.constant dense<0.000000e+00> : vector<16x4xf32>
    %18 = tpu.matmul %16, %17, %cst_14 {dimension_numbers = #tpu.dot_dimension_numbers<[1], [0], [0], [1], [0, 0, 1, 1], [], []>} : vector<16x256xbf16>, vector<256x4xbf16>, vector<16x4xf32> -> vector<16x4xf32>
    %c0_15 = arith.constant 0 : index
    %c0_16 = arith.constant 0 : index
    %19 = vector.load %arg7[%c0_15, %c0_16] : memref<1x4xf32, #tpu.memory_space<vmem>>, vector<1x4xf32>
    %20 = vector.broadcast %19 : vector<1x4xf32> to vector<16x4xf32>
    %21 = arith.addf %18, %20 : vector<16x4xf32>
    %22 = math.tanh %21 : vector<16x4xf32>
    %c0_17 = arith.constant 0 : index
    %c0_18 = arith.constant 0 : index
    %23 = vector.load %arg8[%c0_17, %c0_18] : memref<16x4xf32, #tpu.memory_space<vmem>>, vector<16x4xf32>
    tpu.vector_store %arg8[%c0_17, %c0_18], %22 {strides = array<i32>} : memref<16x4xf32, #tpu.memory_space<vmem>>, vector<16x4xf32>,
    return
  }
  func.func @transform_0(%arg0: i32) -> (i32, i32) {
    %c0_i32 = arith.constant 0 : i32
    %c0_i32_0 = arith.constant 0 : i32
    return %arg0, %c0_i32 : i32, i32
  }
  func.func @transform_1(%arg0: i32) -> (i32, i32) {
    %c0_i32 = arith.constant 0 : i32
    %c0_i32_0 = arith.constant 0 : i32
    %c0_i32_1 = arith.constant 0 : i32
    return %c0_i32, %c0_i32_0 : i32, i32
  }
  func.func @transform_2(%arg0: i32) -> (i32, i32) {
    %c0_i32 = arith.constant 0 : i32
    %c0_i32_0 = arith.constant 0 : i32
    %c0_i32_1 = arith.constant 0 : i32
    return %c0_i32, %c0_i32_0 : i32, i32
  }
  func.func @transform_3(%arg0: i32) -> (i32, i32) {
    %c0_i32 = arith.constant 0 : i32
    %c0_i32_0 = arith.constant 0 : i32
    %c0_i32_1 = arith.constant 0 : i32
    return %c0_i32, %c0_i32_0 : i32, i32
  }
  func.func @transform_4(%arg0: i32) -> (i32, i32) {
    %c0_i32 = arith.constant 0 : i32
    %c0_i32_0 = arith.constant 0 : i32
    %c0_i32_1 = arith.constant 0 : i32
    return %c0_i32, %c0_i32_0 : i32, i32
  }
  func.func @transform_5(%arg0: i32) -> (i32, i32) {
    %c0_i32 = arith.constant 0 : i32
    %c0_i32_0 = arith.constant 0 : i32
    %c0_i32_1 = arith.constant 0 : i32
    return %c0_i32, %c0_i32_0 : i32, i32
  }
  func.func @transform_6(%arg0: i32) -> (i32, i32) {
    %c0_i32 = arith.constant 0 : i32
    %c0_i32_0 = arith.constant 0 : i32
    %c0_i32_1 = arith.constant 0 : i32
    return %c0_i32, %c0_i32_0 : i32, i32
  }
  func.func @transform_7(%arg0: i32) -> (i32, i32) {
    %c0_i32 = arith.constant 0 : i32
    %c0_i32_0 = arith.constant 0 : i32
    return %arg0, %c0_i32 : i32, i32
  }
}

module attributes {stable_mosaic.version = 11 : i64} {
  func.func @_policy_kernel(%arg0: i32, %arg1: memref<16x32xbf16, #tpu.memory_space<vmem>>, %arg2: memref<32x256xbf16, #tpu.memory_space<vmem>>, %arg3: memref<1x256xf32, #tpu.memory_space<vmem>>, %arg4: memref<256x256xbf16, #tpu.memory_space<vmem>>, %arg5: memref<1x256xf32, #tpu.memory_space<vmem>>, %arg6: memref<256x4xbf16, #tpu.memory_space<vmem>>, %arg7: memref<1x4xf32, #tpu.memory_space<vmem>>, %arg8: memref<16x4xf32, #tpu.memory_space<vmem>>) attributes {dimension_semantics = [#tpu.dimension_semantics<parallel>], iteration_bounds = array<i64: 1>, scalar_prefetch = 0 : i64, scratch_operands = 0 : i64, tpu.core_type = #tpu.core_type<tc>, window_params = [{transform_indices = @transform_0, window_bounds = array<i64: 16, 32>}, {pipeline_mode = #tpu.pipeline_mode<synchronous>, transform_indices = @transform_1, window_bounds = array<i64: 32, 256>}, {pipeline_mode = #tpu.pipeline_mode<synchronous>, transform_indices = @transform_2, window_bounds = array<i64: 1, 256>}, {pipeline_mode = #tpu.pipeline_mode<synchronous>, transform_indices = @transform_3, window_bounds = array<i64: 256, 256>}, {pipeline_mode = #tpu.pipeline_mode<synchronous>, transform_indices = @transform_4, window_bounds = array<i64: 1, 256>}, {pipeline_mode = #tpu.pipeline_mode<synchronous>, transform_indices = @transform_5, window_bounds = array<i64: 256, 4>}, {pipeline_mode = #tpu.pipeline_mode<synchronous>, transform_indices = @transform_6, window_bounds = array<i64: 1, 4>}, {transform_indices = @transform_7, window_bounds = array<i64: 16, 4>}]} {
    %c0 = arith.constant 0 : index
    %c0_0 = arith.constant 0 : index
    %0 = vector.load %arg1[%c0, %c0_0] : memref<16x32xbf16, #tpu.memory_space<vmem>>, vector<16x32xbf16>
    %c0_1 = arith.constant 0 : index
    %c0_2 = arith.constant 0 : index
    %1 = vector.load %arg2[%c0_1, %c0_2] : memref<32x256xbf16, #tpu.memory_space<vmem>>, vector<32x256xbf16>
    %cst = arith.constant dense<0.000000e+00> : vector<16x256xf32>
    %2 = tpu.matmul %0, %1, %cst {dimension_numbers = #tpu.dot_dimension_numbers<[1], [0], [0], [1], [0, 0, 1, 1], [], []>} : vector<16x32xbf16>, vector<32x256xbf16>, vector<16x256xf32> -> vector<16x256xf32>
    %c0_3 = arith.constant 0 : index
    %c0_4 = arith.constant 0 : index
    %3 = vector.load %arg3[%c0_3, %c0_4] : memref<1x256xf32, #tpu.memory_space<vmem>>, vector<1x256xf32>
    %4 = vector.broadcast %3 : vector<1x256xf32> to vector<16x256xf32>
    %5 = arith.addf %2, %4 : vector<16x256xf32>
    %cst_5 = arith.constant 0.000000e+00 : f32
    %6 = vector.broadcast %cst_5 : f32 to vector<16x256xf32>
    %7 = arith.maximumf %5, %6 : vector<16x256xf32>
    %8 = arith.truncf %7 : vector<16x256xf32> to vector<16x256xbf16>
    %c0_6 = arith.constant 0 : index
    %c0_7 = arith.constant 0 : index
    %9 = vector.load %arg4[%c0_6, %c0_7] : memref<256x256xbf16, #tpu.memory_space<vmem>>, vector<256x256xbf16>
    %cst_8 = arith.constant dense<0.000000e+00> : vector<16x256xf32>
    %10 = tpu.matmul %8, %9, %cst_8 {dimension_numbers = #tpu.dot_dimension_numbers<[1], [0], [0], [1], [0, 0, 1, 1], [], []>} : vector<16x256xbf16>, vector<256x256xbf16>, vector<16x256xf32> -> vector<16x256xf32>
    %c0_9 = arith.constant 0 : index
    %c0_10 = arith.constant 0 : index
    %11 = vector.load %arg5[%c0_9, %c0_10] : memref<1x256xf32, #tpu.memory_space<vmem>>, vector<1x256xf32>
    %12 = vector.broadcast %11 : vector<1x256xf32> to vector<16x256xf32>
    %13 = arith.addf %10, %12 : vector<16x256xf32>
    %cst_11 = arith.constant 0.000000e+00 : f32
    %14 = vector.broadcast %cst_11 : f32 to vector<16x256xf32>
    %15 = arith.maximumf %13, %14 : vector<16x256xf32>
    %16 = arith.truncf %15 : vector<16x256xf32> to vector<16x256xbf16>
    %c0_12 = arith.constant 0 : index
    %c0_13 = arith.constant 0 : index
    %17 = vector.load %arg6[%c0_12, %c0_13] : memref<256x4xbf16, #tpu.memory_space<vmem>>, vector<256x4xbf16>
    %cst_14 = arith.constant dense<0.000000e+00> : vector<16x4xf32>
    %18 = tpu.matmul %16, %17, %cst_14 {dimension_numbers = #tpu.dot_dimension_numbers<[1], [0], [0], [1], [0, 0, 1, 1], [], []>} : vector<16x256xbf16>, vector<256x4xbf16>, vector<16x4xf32> -> vector<16x4xf32>
    %c0_15 = arith.constant 0 : index
    %c0_16 = arith.constant 0 : index
    %19 = vector.load %arg7[%c0_15, %c0_16] : memref<1x4xf32, #tpu.memory_space<vmem>>, vector<1x4xf32>
    %20 = vector.broadcast %19 : vector<1x4xf32> to vector<16x4xf32>
    %21 = arith.addf %18, %20 : vector<16x4xf32>
    %22 = math.tanh %21 : vector<16x4xf32>
    %c0_17 = arith.constant 0 : index
    %c0_18 = arith.constant 0 : index
    %23 = vector.load %arg8[%c0_17, %c0_18] : memref<16x4xf32, #tpu.memory_space<vmem>>, vector<16x4xf32>
    tpu.vector_store %arg8[%c0_17, %c0_18], %22 {strides = array<i32>} : memref<16x4xf32, #tpu.memory_space<vmem>>, vector<16x4xf32>,
    return
  }
  func.func @transform_0(%arg0: i32) -> (i32, i32) {
    %c0_i32 = arith.constant 0 : i32
    %c0_i32_0 = arith.constant 0 : i32
    return %arg0, %c0_i32 : i32, i32
  }
  func.func @transform_1(%arg0: i32) -> (i32, i32) {
    %c0_i32 = arith.constant 0 : i32
    %c0_i32_0 = arith.constant 0 : i32
    %c0_i32_1 = arith.constant 0 : i32
    return %c0_i32, %c0_i32_0 : i32, i32
  }
  func.func @transform_2(%arg0: i32) -> (i32, i32) {
    %c0_i32 = arith.constant 0 : i32
    %c0_i32_0 = arith.constant 0 : i32
    %c0_i32_1 = arith.constant 0 : i32
    return %c0_i32, %c0_i32_0 : i32, i32
  }
  func.func @transform_3(%arg0: i32) -> (i32, i32) {
    %c0_i32 = arith.constant 0 : i32
    %c0_i32_0 = arith.constant 0 : i32
    %c0_i32_1 = arith.constant 0 : i32
    return %c0_i32, %c0_i32_0 : i32, i32
  }
  func.func @transform_4(%arg0: i32) -> (i32, i32) {
    %c0_i32 = arith.constant 0 : i32
    %c0_i32_0 = arith.constant 0 : i32
    %c0_i32_1 = arith.constant 0 : i32
    return %c0_i32, %c0_i32_0 : i32, i32
  }
  func.func @transform_5(%arg0: i32) -> (i32, i32) {
    %c0_i32 = arith.constant 0 : i32
    %c0_i32_0 = arith.constant 0 : i32
    %c0_i32_1 = arith.constant 0 : i32
    return %c0_i32, %c0_i32_0 : i32, i32
  }
  func.func @transform_6(%arg0: i32) -> (i32, i32) {
    %c0_i32 = arith.constant 0 : i32
    %c0_i32_0 = arith.constant 0 : i32
    %c0_i32_1 = arith.constant 0 : i32
    return %c0_i32, %c0_i32_0 : i32, i32
  }
  func.func @transform_7(%arg0: i32) -> (i32, i32) {
    %c0_i32 = arith.constant 0 : i32
    %c0_i32_0 = arith.constant 0 : i32
    return %arg0, %c0_i32 : i32, i32
  }
}

</mosaic_0001>

<llo_original>
// kernel: tpu_custom_call.1
$region0: #{tpu_custom_call.1}
  #allocation0 [shape = 'u32[]', space=smem, size = 0x4, offset = 0x4, fixed_abs, tag = 'smem constant byte address 0x4 - core index']
  #allocation1 [shape = 'u32[144,128]{1,0:T(1,128)}', space=vmem, size = 0x12000, scoped, tag = 'internal scratch']
  %s0 = inlined_call_operand.vmem [shape: bf16[16,32], index: 0, kind: input, shape index: {}]
  %s1 = inlined_call_operand.vmem [shape: bf16[32,256], index: 1, kind: input, shape index: {}]
  %s2 = inlined_call_operand.vmem [shape: f32[1,256], index: 2, kind: input, shape index: {}]
  %s3 = inlined_call_operand.hbm [shape: bf16[256,256], index: 3, kind: input, shape index: {}]
  %s4 = inlined_call_operand.vmem [shape: f32[1,256], index: 4, kind: input, shape index: {}]
  %s5 = inlined_call_operand.vmem [shape: bf16[256,4], index: 5, kind: input, shape index: {}]
  %s6 = inlined_call_operand.vmem [shape: f32[1,4], index: 6, kind: input, shape index: {}]
  %s7 = inlined_call_operand.vmem [shape: f32[16,4], index: 7, kind: output, shape index: {}]
  %s8 = sld [smem:[#allocation0]]
  $region42: #{tpu_custom_call.1} parent=0
    _
  %s10 = ssub.s32 1, %s8
  %s11 = scalar_select 0, %s10, %s8
  $region1: #{tpu_custom_call.1} parent=0
    #allocation2 [shape = 'u8[131072]{0}', space=vmem, size = 0x20000, scoped, tag = 'input window, operand 3, single buffered']
    #allocation3 [shape = 's32[1]{0}', space=sflag, size = 0x4, scoped, tag = 'scoped memory for tpu_custom_call.1']
    %12 = vsyncpa [#allocation3], 0
    // Predicated region
    $region2: #{tpu_custom_call.1} parent=1 // pred_check
      _
    $region3: #{tpu_custom_call.1} parent=1 // pred_check_branch
      %14 = sbr.rel (0) target = $region5
    $region4: #{tpu_custom_call.1} parent=1 // pred_region
      _
    $region5: #{tpu_custom_call.1} parent=1 // pred_fallthru
      _
    // Predicated region
    $region6: #{tpu_custom_call.1} parent=1 // pred_check
      _
    $region7: #{tpu_custom_call.1} parent=1 // pred_check_branch
      %16 = sbr.rel (0) target = $region9
    $region8: #{tpu_custom_call.1} parent=1 // pred_region
      _
    $region9: #{tpu_custom_call.1} parent=1 // pred_fallthru
      _
    // Predicated region
    $region10: #{tpu_custom_call.1} parent=1 // pred_check
      _
    $region11: #{tpu_custom_call.1} parent=1 // pred_check_branch
      %18 = sbr.rel (0) target = $region13
    $region12: #{tpu_custom_call.1} parent=1 // pred_region
      _
    $region13: #{tpu_custom_call.1} parent=1 // pred_fallthru
      _
    // Predicated region
    $region14: #{tpu_custom_call.1} parent=1 // pred_check
      _
    $region15: #{tpu_custom_call.1} parent=1 // pred_check_branch
      %20 = sbr.rel (0) target = $region17
    $region16: #{tpu_custom_call.1} parent=1 // pred_region
      %s22 = ssub.s32 4096, 4096
      %23 = vsyncadd [#allocation3], %s22
      %s24 = sshll.u32 [#allocation2], 4
      %s25 = int_to_ptr.vmem [resolvable:$true] %s24
      %30 = dma.hbm_to_vmem [thread:$0]  %s3, 4096, %s25, [#allocation3], 128, 128, 8
    $region17: #{tpu_custom_call.1} parent=1 // pred_fallthru
      _
    // Predicated region
    $region18: #{tpu_custom_call.1} parent=1 // pred_check
      _
    $region19: #{tpu_custom_call.1} parent=1 // pred_check_branch
      %32 = sbr.rel (0) target = $region21
    $region20: #{tpu_custom_call.1} parent=1 // pred_region
      _
    $region21: #{tpu_custom_call.1} parent=1 // pred_fallthru
      _
    // Predicated region
    $region22: #{tpu_custom_call.1} parent=1 // pred_check
      _
    $region23: #{tpu_custom_call.1} parent=1 // pred_check_branch
      %34 = sbr.rel (0) target = $region25
    $region24: #{tpu_custom_call.1} parent=1 // pred_region
      _
    $region25: #{tpu_custom_call.1} parent=1 // pred_fallthru
      _
    // Predicated region
    $region26: #{tpu_custom_call.1} parent=1 // pred_check
      _
    $region27: #{tpu_custom_call.1} parent=1 // pred_check_branch
      %36 = sbr.rel (0) target = $region29
    $region28: #{tpu_custom_call.1} parent=1 // pred_region
      _
    $region29: #{tpu_custom_call.1} parent=1 // pred_fallthru
      _
    // Predicated region
    $region30: #{tpu_custom_call.1} parent=1 // pred_check
      _
    $region31: #{tpu_custom_call.1} parent=1 // pred_check_branch
      %38 = sbr.rel (0) target = $region33
    $region32: #{tpu_custom_call.1} parent=1 // pred_region
      %39 = dma.done [#allocation3], 4096
    $region33: #{tpu_custom_call.1} parent=1 // pred_fallthru
      _
    %v41 = vld [vmem:[%s0] sm:$0xf]
    %v42 = vld [vmem:[%s0 + $0x4] sm:$0xf]
    %v43 = vld [vmem:[%s1] sm:$0xff]
    %v44 = vld [vmem:[%s1 + $0x8] sm:$0xff]
    %v45 = vld [vmem:[%s1 + $0x10] sm:$0xff]
    %v46 = vld [vmem:[%s1 + $0x18] sm:$0xff]
    %v47 = vld [vmem:[%s2] sm:$0x3]
    %v49 = vlaneseq
    %v50 = vshrl.u32 %v49, 7
    %v51 = vsub.s32 0, %v50
    %v52 = vrot.slane %v47, %v51
    %v53 = vlaneseq
    %v54 = vshrl.u32 %v53, 7
    %v55 = vsub.s32 1, %v54
    %v56 = vrot.slane %v47, %v55
    %v61 = vunpack.c.l.b16 %v41
    %v62 = vunpack.c.l.b16 %v42
    %v63 = vpack.c.b16 %v62, %v61
    %v68 = vunpack.c.l.b16 %v43
    %v69 = vunpack.c.h.b16 %v43
    %v70 = vunpack.c.l.b16 %v44
    %v71 = vunpack.c.h.b16 %v44
    %v72 = vunpack.c.l.b16 %v45
    %v73 = vunpack.c.h.b16 %v45
    %v74 = vunpack.c.l.b16 %v46
    %v75 = vunpack.c.h.b16 %v46
    %v76 = vpack.c.b16 %v70, %v68
    %v77 = vpack.c.b16 %v71, %v69
    %v78 = vpack.c.b16 %v74, %v72
    %v79 = vpack.c.b16 %v75, %v73
    %vm84 = vcmask 261120
    %v86 = vsel %vm84, %v63, 0
    %88 = vmatprep.subr.bf16.mxu0 %v77
    %89 = vmatpush1.bf16.msra.mxu0 %v76
    %90 = vmatprep.subr.bf16.mxu0 %v79
    %91 = vmatpush1.bf16.msra.mxu0 %v78
    %92 = vmatprep.subr.bf16.mxu0 0
    %93 = vmatpush1.bf16.msra.mxu0 0
    %94 = vmatprep.subr.bf16.mxu0 0
    %95 = vmatpush1.bf16.msra.mxu0 0
    %96 = vmatprep.subr.bf16.mxu0 0
    %97 = vmatpush1.bf16.msra.mxu0 0
    %98 = vmatprep.subr.bf16.mxu0 0
    %99 = vmatpush1.bf16.msra.mxu0 0
    %100 = vmatprep.subr.bf16.mxu0 0
    %101 = vmatpush1.bf16.msra.mxu0 0
    %102 = vmatprep.subr.bf16.mxu0 0
    %103 = vmatpush1.bf16.msra.mxu0 0
    %104 = vmatprep.subr.bf16.mxu0 0
    %105 = vmatpush1.bf16.msra.mxu0 0
    %106 = vmatprep.subr.bf16.mxu0 0
    %107 = vmatpush1.bf16.msra.mxu0 0
    %108 = vmatprep.subr.bf16.mxu0 0
    %109 = vmatpush1.bf16.msra.mxu0 0
    %110 = vmatprep.subr.bf16.mxu0 0
    %111 = vmatpush1.bf16.msra.mxu0 0
    %112 = vmatprep.subr.bf16.mxu0 0
    %113 = vmatpush1.bf16.msra.mxu0 0
    %114 = vmatprep.subr.bf16.mxu0 0
    %115 = vmatpush1.bf16.msra.mxu0 0
    %116 = vmatprep.subr.bf16.mxu0 0
    %117 = vmatpush1.bf16.msra.mxu0 0
    %118 = vmatprep.subr.bf16.mxu0 0
    %119 = vmatpush1.bf16.msra.mxu0 0
    %120 = vmatprep.mubr.bf16.mxu0 0
    %121 = vmatmul.mubr.bf16.gmra.mrb[0].mxu0 %v86
    %v122 = vpop.f32.mrb[0].mxu0
    %v123 = vadd.f32 %v52, %v122
    %v124 = vpop.f32.mrb[0].mxu0
    %v125 = vadd.f32 %v56, %v124
    %v126 = vpop.f32.mrb[0].mxu0
    %v127 = vadd.f32 %v52, %v126
    %v128 = vpop.f32.mrb[0].mxu0
    %v129 = vadd.f32 %v56, %v128
    %130 = vdwg.mxu0
    %v131 = vmax.f32 %v123, 0.0
    %v132 = vmax.f32 %v125, 0.0
    %v133 = vmax.f32 %v127, 0.0
    %v134 = vmax.f32 %v129, 0.0
    %v135 = vpack.c.bf16 %v133, %v131
    %v136 = vpack.c.bf16 %v134, %v132
    %v137 = vld [vmem:[#allocation2] sm:$0xff]
    %v138 = vld [vmem:[#allocation2 + $0x8] sm:$0xff]
    %v139 = vld [vmem:[#allocation2 + $0x10] sm:$0xff]
    %v140 = vld [vmem:[#allocation2 + $0x18] sm:$0xff]
    %v141 = vld [vmem:[#allocation2 + $0x20] sm:$0xff]
    %v142 = vld [vmem:[#allocation2 + $0x28] sm:$0xff]
    %v143 = vld [vmem:[#allocation2 + $0x30] sm:$0xff]
    %v144 = vld [vmem:[#allocation2 + $0x38] sm:$0xff]
    %v145 = vld [vmem:[#allocation2 + $0x40] sm:$0xff]
    %v146 = vld [vmem:[#allocation2 + $0x48] sm:$0xff]
    %v147 = vld [vmem:[#allocation2 + $0x50] sm:$0xff]
    %v148 = vld [vmem:[#allocation2 + $0x58] sm:$0xff]
    %v149 = vld [vmem:[#allocation2 + $0x60] sm:$0xff]
    %v150 = vld [vmem:[#allocation2 + $0x68] sm:$0xff]
    %v151 = vld [vmem:[#allocation2 + $0x70] sm:$0xff]
    %v152 = vld [vmem:[#allocation2 + $0x78] sm:$0xff]
    %v153 = vld [vmem:[#allocation2 + $0x80] sm:$0xff]
    %v154 = vld [vmem:[#allocation2 + $0x88] sm:$0xff]
    %v155 = vld [vmem:[#allocation2 + $0x90] sm:$0xff]
    %v156 = vld [vmem:[#allocation2 + $0x98] sm:$0xff]
    %v157 = vld [vmem:[#allocation2 + $0xa0] sm:$0xff]
    %v158 = vld [vmem:[#allocation2 + $0xa8] sm:$0xff]
    %v159 = vld [vmem:[#allocation2 + $0xb0] sm:$0xff]
    %v160 = vld [vmem:[#allocation2 + $0xb8] sm:$0xff]
    %v161 = vld [vmem:[#allocation2 + $0xc0] sm:$0xff]
    %v162 = vld [vmem:[#allocation2 + $0xc8] sm:$0xff]
    %v163 = vld [vmem:[#allocation2 + $0xd0] sm:$0xff]
    %v164 = vld [vmem:[#allocation2 + $0xd8] sm:$0xff]
    %v165 = vld [vmem:[#allocation2 + $0xe0] sm:$0xff]
    %v166 = vld [vmem:[#allocation2 + $0xe8] sm:$0xff]
    %v167 = vld [vmem:[#allocation2 + $0xf0] sm:$0xff]
    %v168 = vld [vmem:[#allocation2 + $0xf8] sm:$0xff]
    %v169 = vld [vmem:[%s4] sm:$0x3]
    %v171 = vlaneseq
    %v172 = vshrl.u32 %v171, 7
    %v173 = vsub.s32 0, %v172
    %v174 = vrot.slane %v169, %v173
    %v175 = vlaneseq
    %v176 = vshrl.u32 %v175, 7
    %v177 = vsub.s32 1, %v176
    %v178 = vrot.slane %v169, %v177
    %v213 = vunpack.c.l.b16 %v137
    %v214 = vunpack.c.h.b16 %v137
    %v215 = vunpack.c.l.b16 %v138
    %v216 = vunpack.c.h.b16 %v138
    %v217 = vunpack.c.l.b16 %v139
    %v218 = vunpack.c.h.b16 %v139
    %v219 = vunpack.c.l.b16 %v140
    %v220 = vunpack.c.h.b16 %v140
    %v221 = vunpack.c.l.b16 %v141
    %v222 = vunpack.c.h.b16 %v141
    %v223 = vunpack.c.l.b16 %v142
    %v224 = vunpack.c.h.b16 %v142
    %v225 = vunpack.c.l.b16 %v143
    %v226 = vunpack.c.h.b16 %v143
    %v227 = vunpack.c.l.b16 %v144
    %v228 = vunpack.c.h.b16 %v144
    %v229 = vunpack.c.l.b16 %v145
    %v230 = vunpack.c.h.b16 %v145
    %v231 = vunpack.c.l.b16 %v146
    %v232 = vunpack.c.h.b16 %v146
    %v233 = vunpack.c.l.b16 %v147
    %v234 = vunpack.c.h.b16 %v147
    %v235 = vunpack.c.l.b16 %v148
    %v236 = vunpack.c.h.b16 %v148
    %v237 = vunpack.c.l.b16 %v149
    %v238 = vunpack.c.h.b16 %v149
    %v239 = vunpack.c.l.b16 %v150
    %v240 = vunpack.c.h.b16 %v150
    %v241 = vunpack.c.l.b16 %v151
    %v242 = vunpack.c.h.b16 %v151
    %v243 = vunpack.c.l.b16 %v152
    %v244 = vunpack.c.h.b16 %v152
    %v245 = vunpack.c.l.b16 %v153
    %v246 = vunpack.c.h.b16 %v153
    %v247 = vunpack.c.l.b16 %v154
    %v248 = vunpack.c.h.b16 %v154
    %v249 = vunpack.c.l.b16 %v155
    %v250 = vunpack.c.h.b16 %v155
    %v251 = vunpack.c.l.b16 %v156
    %v252 = vunpack.c.h.b16 %v156
    %v253 = vunpack.c.l.b16 %v157
    %v254 = vunpack.c.h.b16 %v157
    %v255 = vunpack.c.l.b16 %v158
    %v256 = vunpack.c.h.b16 %v158
    %v257 = vunpack.c.l.b16 %v159
    %v258 = vunpack.c.h.b16 %v159
    %v259 = vunpack.c.l.b16 %v160
    %v260 = vunpack.c.h.b16 %v160
    %v261 = vunpack.c.l.b16 %v161
    %v262 = vunpack.c.h.b16 %v161
    %v263 = vunpack.c.l.b16 %v162
    %v264 = vunpack.c.h.b16 %v162
    %v265 = vunpack.c.l.b16 %v163
    %v266 = vunpack.c.h.b16 %v163
    %v267 = vunpack.c.l.b16 %v164
    %v268 = vunpack.c.h.b16 %v164
    %v269 = vunpack.c.l.b16 %v165
    %v270 = vunpack.c.h.b16 %v165
    %v271 = vunpack.c.l.b16 %v166
    %v272 = vunpack.c.h.b16 %v166
    %v273 = vunpack.c.l.b16 %v167
    %v274 = vunpack.c.h.b16 %v167
    %v275 = vunpack.c.l.b16 %v168
    %v276 = vunpack.c.h.b16 %v168
    %v277 = vpack.c.b16 %v215, %v213
    %v278 = vpack.c.b16 %v216, %v214
    %v279 = vpack.c.b16 %v219, %v217
    %v280 = vpack.c.b16 %v220, %v218
    %v281 = vpack.c.b16 %v223, %v221
    %v282 = vpack.c.b16 %v224, %v222
    %v283 = vpack.c.b16 %v227, %v225
    %v284 = vpack.c.b16 %v228, %v226
    %v285 = vpack.c.b16 %v231, %v229
    %v286 = vpack.c.b16 %v232, %v230
    %v287 = vpack.c.b16 %v235, %v233
    %v288 = vpack.c.b16 %v236, %v234
    %v289 = vpack.c.b16 %v239, %v237
    %v290 = vpack.c.b16 %v240, %v238
    %v291 = vpack.c.b16 %v243, %v241
    %v292 = vpack.c.b16 %v244, %v242
    %v293 = vpack.c.b16 %v247, %v245
    %v294 = vpack.c.b16 %v248, %v246
    %v295 = vpack.c.b16 %v251, %v249
    %v296 = vpack.c.b16 %v252, %v250
    %v297 = vpack.c.b16 %v255, %v253
    %v298 = vpack.c.b16 %v256, %v254
    %v299 = vpack.c.b16 %v259, %v257
    %v300 = vpack.c.b16 %v260, %v258
    %v301 = vpack.c.b16 %v263, %v261
    %v302 = vpack.c.b16 %v264, %v262
    %v303 = vpack.c.b16 %v267, %v265
    %v304 = vpack.c.b16 %v268, %v266
    %v305 = vpack.c.b16 %v271, %v269
    %v306 = vpack.c.b16 %v272, %v270
    %v307 = vpack.c.b16 %v275, %v273
    %v308 = vpack.c.b16 %v276, %v274
    %341 = vmatprep.subr.bf16.mxu0 %v278
    %342 = vmatpush1.bf16.msra.mxu0 %v277
    %343 = vmatprep.subr.bf16.mxu0 %v280
    %344 = vmatpush1.bf16.msra.mxu0 %v279
    %345 = vmatprep.subr.bf16.mxu0 %v282
    %346 = vmatpush1.bf16.msra.mxu0 %v281
    %347 = vmatprep.subr.bf16.mxu0 %v284
    %348 = vmatpush1.bf16.msra.mxu0 %v283
    %349 = vmatprep.subr.bf16.mxu0 %v286
    %350 = vmatpush1.bf16.msra.mxu0 %v285
    %351 = vmatprep.subr.bf16.mxu0 %v288
    %352 = vmatpush1.bf16.msra.mxu0 %v287
    %353 = vmatprep.subr.bf16.mxu0 %v290
    %354 = vmatpush1.bf16.msra.mxu0 %v289
    %355 = vmatprep.subr.bf16.mxu0 %v292
    %356 = vmatpush1.bf16.msra.mxu0 %v291
    %357 = vmatprep.subr.bf16.mxu0 %v294
    %358 = vmatpush1.bf16.msra.mxu0 %v293
    %359 = vmatprep.subr.bf16.mxu0 %v296
    %360 = vmatpush1.bf16.msra.mxu0 %v295
    %361 = vmatprep.subr.bf16.mxu0 %v298
    %362 = vmatpush1.bf16.msra.mxu0 %v297
    %363 = vmatprep.subr.bf16.mxu0 %v300
    %364 = vmatpush1.bf16.msra.mxu0 %v299
    %365 = vmatprep.subr.bf16.mxu0 %v302
    %366 = vmatpush1.bf16.msra.mxu0 %v301
    %367 = vmatprep.subr.bf16.mxu0 %v304
    %368 = vmatpush1.bf16.msra.mxu0 %v303
    %369 = vmatprep.subr.bf16.mxu0 %v306
    %370 = vmatpush1.bf16.msra.mxu0 %v305
    %371 = vmatprep.subr.bf16.mxu0 %v308
    %372 = vmatpush1.bf16.msra.mxu0 %v307
    %373 = vmatprep.mubr.bf16.mxu0 %v136
    %374 = vmatmul.mubr.bf16.gmra.mrb[0].mxu0 %v135
    %v375 = vpop.f32.mrb[0].mxu0
    %v376 = vadd.f32 %v174, %v375
    %v377 = vpop.f32.mrb[0].mxu0
    %v378 = vadd.f32 %v178, %v377
    %v379 = vpop.f32.mrb[0].mxu0
    %v380 = vadd.f32 %v174, %v379
    %v381 = vpop.f32.mrb[0].mxu0
    %v382 = vadd.f32 %v178, %v381
    %383 = vdwg.mxu0
    %v384 = vmax.f32 %v376, 0.0
    %v385 = vmax.f32 %v378, 0.0
    %v386 = vmax.f32 %v380, 0.0
    %v387 = vmax.f32 %v382, 0.0
    %v388 = vpack.c.bf16 %v386, %v384
    %v389 = vpack.c.bf16 %v387, %v385
    %v390 = vld [vmem:[%s5] sm:$0xf]
    %v391 = vld [vmem:[%s5 + $0x4] sm:$0xf]
    %v392 = vld [vmem:[%s5 + $0x8] sm:$0xf]
    %v393 = vld [vmem:[%s5 + $0xc] sm:$0xf]
    %v394 = vld [vmem:[%s5 + $0x10] sm:$0xf]
    %v395 = vld [vmem:[%s5 + $0x14] sm:$0xf]
    %v396 = vld [vmem:[%s5 + $0x18] sm:$0xf]
    %v397 = vld [vmem:[%s5 + $0x1c] sm:$0xf]
    %v398 = vld [vmem:[%s5 + $0x20] sm:$0xf]
    %v399 = vld [vmem:[%s5 + $0x24] sm:$0xf]
    %v400 = vld [vmem:[%s5 + $0x28] sm:$0xf]
    %v401 = vld [vmem:[%s5 + $0x2c] sm:$0xf]
    %v402 = vld [vmem:[%s5 + $0x30] sm:$0xf]
    %v403 = vld [vmem:[%s5 + $0x34] sm:$0xf]
    %v404 = vld [vmem:[%s5 + $0x38] sm:$0xf]
    %v405 = vld [vmem:[%s5 + $0x3c] sm:$0xf]
    %v406 = vld [vmem:[%s5 + $0x40] sm:$0xf]
    %v407 = vld [vmem:[%s5 + $0x44] sm:$0xf]
    %v408 = vld [vmem:[%s5 + $0x48] sm:$0xf]
    %v409 = vld [vmem:[%s5 + $0x4c] sm:$0xf]
    %v410 = vld [vmem:[%s5 + $0x50] sm:$0xf]
    %v411 = vld [vmem:[%s5 + $0x54] sm:$0xf]
    %v412 = vld [vmem:[%s5 + $0x58] sm:$0xf]
    %v413 = vld [vmem:[%s5 + $0x5c] sm:$0xf]
    %v414 = vld [vmem:[%s5 + $0x60] sm:$0xf]
    %v415 = vld [vmem:[%s5 + $0x64] sm:$0xf]
    %v416 = vld [vmem:[%s5 + $0x68] sm:$0xf]
    %v417 = vld [vmem:[%s5 + $0x6c] sm:$0xf]
    %v418 = vld [vmem:[%s5 + $0x70] sm:$0xf]
    %v419 = vld [vmem:[%s5 + $0x74] sm:$0xf]
    %v420 = vld [vmem:[%s5 + $0x78] sm:$0xf]
    %v421 = vld [vmem:[%s5 + $0x7c] sm:$0xf]
    %v422 = vld [vmem:[%s6] sm:$0x1]
    %v424 = vlaneseq
    %v425 = vshrl.u32 %v424, 7
    %v426 = vsub.s32 0, %v425
    %v427 = vrot.slane %v422, %v426
    %v461 = vunpack.c.l.b16 %v390
    %v462 = vunpack.c.l.b16 %v391
    %v463 = vunpack.c.l.b16 %v392
    %v464 = vunpack.c.l.b16 %v393
    %v465 = vunpack.c.l.b16 %v394
    %v466 = vunpack.c.l.b16 %v395
    %v467 = vunpack.c.l.b16 %v396
    %v468 = vunpack.c.l.b16 %v397
    %v469 = vunpack.c.l.b16 %v398
    %v470 = vunpack.c.l.b16 %v399
    %v471 = vunpack.c.l.b16 %v400
    %v472 = vunpack.c.l.b16 %v401
    %v473 = vunpack.c.l.b16 %v402
    %v474 = vunpack.c.l.b16 %v403
    %v475 = vunpack.c.l.b16 %v404
    %v476 = vunpack.c.l.b16 %v405
    %v477 = vunpack.c.l.b16 %v406
    %v478 = vunpack.c.l.b16 %v407
    %v479 = vunpack.c.l.b16 %v408
    %v480 = vunpack.c.l.b16 %v409
    %v481 = vunpack.c.l.b16 %v410
    %v482 = vunpack.c.l.b16 %v411
    %v483 = vunpack.c.l.b16 %v412
    %v484 = vunpack.c.l.b16 %v413
    %v485 = vunpack.c.l.b16 %v414
    %v486 = vunpack.c.l.b16 %v415
    %v487 = vunpack.c.l.b16 %v416
    %v488 = vunpack.c.l.b16 %v417
    %v489 = vunpack.c.l.b16 %v418
    %v490 = vunpack.c.l.b16 %v419
    %v491 = vunpack.c.l.b16 %v420
    %v492 = vunpack.c.l.b16 %v421
    %v493 = vpack.c.b16 %v462, %v461
    %v494 = vpack.c.b16 %v464, %v463
    %v495 = vpack.c.b16 %v466, %v465
    %v496 = vpack.c.b16 %v468, %v467
    %v497 = vpack.c.b16 %v470, %v469
    %v498 = vpack.c.b16 %v472, %v471
    %v499 = vpack.c.b16 %v474, %v473
    %v500 = vpack.c.b16 %v476, %v475
    %v501 = vpack.c.b16 %v478, %v477
    %v502 = vpack.c.b16 %v480, %v479
    %v503 = vpack.c.b16 %v482, %v481
    %v504 = vpack.c.b16 %v484, %v483
    %v505 = vpack.c.b16 %v486, %v485
    %v506 = vpack.c.b16 %v488, %v487
    %v507 = vpack.c.b16 %v490, %v489
    %v508 = vpack.c.b16 %v492, %v491
    %525 = vmatprep.subr.bf16.mxu0 0
    %526 = vmatpush1.bf16.msra.mxu0 %v493
    %527 = vmatprep.subr.bf16.mxu0 0
    %528 = vmatpush1.bf16.msra.mxu0 %v494
    %529 = vmatprep.subr.bf16.mxu0 0
    %530 = vmatpush1.bf16.msra.mxu0 %v495
    %531 = vmatprep.subr.bf16.mxu0 0
    %532 = vmatpush1.bf16.msra.mxu0 %v496
    %533 = vmatprep.subr.bf16.mxu0 0
    %534 = vmatpush1.bf16.msra.mxu0 %v497
    %535 = vmatprep.subr.bf16.mxu0 0
    %536 = vmatpush1.bf16.msra.mxu0 %v498
    %537 = vmatprep.subr.bf16.mxu0 0
    %538 = vmatpush1.bf16.msra.mxu0 %v499
    %539 = vmatprep.subr.bf16.mxu0 0
    %540 = vmatpush1.bf16.msra.mxu0 %v500
    %541 = vmatprep.subr.bf16.mxu0 0
    %542 = vmatpush1.bf16.msra.mxu0 %v501
    %543 = vmatprep.subr.bf16.mxu0 0
    %544 = vmatpush1.bf16.msra.mxu0 %v502
    %545 = vmatprep.subr.bf16.mxu0 0
    %546 = vmatpush1.bf16.msra.mxu0 %v503
    %547 = vmatprep.subr.bf16.mxu0 0
    %548 = vmatpush1.bf16.msra.mxu0 %v504
    %549 = vmatprep.subr.bf16.mxu0 0
    %550 = vmatpush1.bf16.msra.mxu0 %v505
    %551 = vmatprep.subr.bf16.mxu0 0
    %552 = vmatpush1.bf16.msra.mxu0 %v506
    %553 = vmatprep.subr.bf16.mxu0 0
    %554 = vmatpush1.bf16.msra.mxu0 %v507
    %555 = vmatprep.subr.bf16.mxu0 0
    %556 = vmatpush1.bf16.msra.mxu0 %v508
    %557 = vmatprep.mubr.bf16.mxu0 %v389
    %558 = vmatmul.mubr.bf16.gmra.mrb[0].mxu0 %v388
    %v559 = vpop.f32.mrb[0].mxu0
    %v560 = vadd.f32 %v427, %v559
    %v561 = vpop.f32.mrb[0].mxu0
    %v562 = vpop.f32.mrb[0].mxu0
    %v563 = vadd.f32 %v427, %v562
    %v564 = vpop.f32.mrb[0].mxu0
    %565 = vdwg.mxu0
    %v566 = vtanh.pop %v560
    %v567 = vtanh.pop %v563
    %vm568 = vcmask 31744
    %569 = vst.msk [vmem:[%s7] sm:$0xff] %vm568, %v566
    %570 = vst.msk [vmem:[%s7 + $0x8] sm:$0xff] %vm568, %v567
    // Predicated region
    $region34: #{tpu_custom_call.1} parent=1 // pred_check
      _
    $region35: #{tpu_custom_call.1} parent=1 // pred_check_branch
      %572 = sbr.rel (0) target = $region37
    $region36: #{tpu_custom_call.1} parent=1 // pred_region
      _
    $region37: #{tpu_custom_call.1} parent=1 // pred_fallthru
      _
    // Predicated region
    $region38: #{tpu_custom_call.1} parent=1 // pred_check
      _
    $region39: #{tpu_custom_call.1} parent=1 // pred_check_branch
      %574 = sbr.rel (0) target = $region41
    $region40: #{tpu_custom_call.1} parent=1 // pred_region
      _
    $region41: #{tpu_custom_call.1} parent=1 // pred_fallthru
      _
    %575 = vsyncpa [#allocation3], 1

// kernel: tpu_custom_call.1
$region0: #{tpu_custom_call.1}
  #allocation0 [shape = 'u32[]', space=smem, size = 0x4, offset = 0x4, fixed_abs, tag = 'smem constant byte address 0x4 - core index']
  #allocation1 [shape = 'u32[144,128]{1,0:T(1,128)}', space=vmem, size = 0x12000, scoped, tag = 'internal scratch']
  %s0 = inlined_call_operand.vmem [shape: bf16[16,32], index: 0, kind: input, shape index: {}]
  %s1 = inlined_call_operand.vmem [shape: bf16[32,256], index: 1, kind: input, shape index: {}]
  %s2 = inlined_call_operand.vmem [shape: f32[1,256], index: 2, kind: input, shape index: {}]
  %s3 = inlined_call_operand.hbm [shape: bf16[256,256], index: 3, kind: input, shape index: {}]
  %s4 = inlined_call_operand.vmem [shape: f32[1,256], index: 4, kind: input, shape index: {}]
  %s5 = inlined_call_operand.vmem [shape: bf16[256,4], index: 5, kind: input, shape index: {}]
  %s6 = inlined_call_operand.vmem [shape: f32[1,4], index: 6, kind: input, shape index: {}]
  %s7 = inlined_call_operand.vmem [shape: f32[16,4], index: 7, kind: output, shape index: {}]
  %s8 = sld [smem:[#allocation0]]
  $region42: #{tpu_custom_call.1} parent=0
    _
  %s10 = ssub.s32 1, %s8
  %s11 = scalar_select 0, %s10, %s8
  $region1: #{tpu_custom_call.1} parent=0
    #allocation2 [shape = 'u8[131072]{0}', space=vmem, size = 0x20000, scoped, tag = 'input window, operand 3, single buffered']
    #allocation3 [shape = 's32[1]{0}', space=sflag, size = 0x4, scoped, tag = 'scoped memory for tpu_custom_call.1']
    %12 = vsyncpa [#allocation3], 0
    // Predicated region
    $region2: #{tpu_custom_call.1} parent=1 // pred_check
      _
    $region3: #{tpu_custom_call.1} parent=1 // pred_check_branch
      %14 = sbr.rel (0) target = $region5
    $region4: #{tpu_custom_call.1} parent=1 // pred_region
      _
    $region5: #{tpu_custom_call.1} parent=1 // pred_fallthru
      _
    // Predicated region
    $region6: #{tpu_custom_call.1} parent=1 // pred_check
      _
    $region7: #{tpu_custom_call.1} parent=1 // pred_check_branch
      %16 = sbr.rel (0) target = $region9
    $region8: #{tpu_custom_call.1} parent=1 // pred_region
      _
    $region9: #{tpu_custom_call.1} parent=1 // pred_fallthru
      _
    // Predicated region
    $region10: #{tpu_custom_call.1} parent=1 // pred_check
      _
    $region11: #{tpu_custom_call.1} parent=1 // pred_check_branch
      %18 = sbr.rel (0) target = $region13
    $region12: #{tpu_custom_call.1} parent=1 // pred_region
      _
    $region13: #{tpu_custom_call.1} parent=1 // pred_fallthru
      _
    // Predicated region
    $region14: #{tpu_custom_call.1} parent=1 // pred_check
      _
    $region15: #{tpu_custom_call.1} parent=1 // pred_check_branch
      %20 = sbr.rel (0) target = $region17
    $region16: #{tpu_custom_call.1} parent=1 // pred_region
      %s22 = ssub.s32 4096, 4096
      %23 = vsyncadd [#allocation3], %s22
      %s24 = sshll.u32 [#allocation2], 4
      %s25 = int_to_ptr.vmem [resolvable:$true] %s24
      %30 = dma.hbm_to_vmem [thread:$0]  %s3, 4096, %s25, [#allocation3], 128, 128, 8
    $region17: #{tpu_custom_call.1} parent=1 // pred_fallthru
      _
    // Predicated region
    $region18: #{tpu_custom_call.1} parent=1 // pred_check
      _
    $region19: #{tpu_custom_call.1} parent=1 // pred_check_branch
      %32 = sbr.rel (0) target = $region21
    $region20: #{tpu_custom_call.1} parent=1 // pred_region
      _
    $region21: #{tpu_custom_call.1} parent=1 // pred_fallthru
      _
    // Predicated region
    $region22: #{tpu_custom_call.1} parent=1 // pred_check
      _
    $region23: #{tpu_custom_call.1} parent=1 // pred_check_branch
      %34 = sbr.rel (0) target = $region25
    $region24: #{tpu_custom_call.1} parent=1 // pred_region
      _
    $region25: #{tpu_custom_call.1} parent=1 // pred_fallthru
      _
    // Predicated region
    $region26: #{tpu_custom_call.1} parent=1 // pred_check
      _
    $region27: #{tpu_custom_call.1} parent=1 // pred_check_branch
      %36 = sbr.rel (0) target = $region29
    $region28: #{tpu_custom_call.1} parent=1 // pred_region
      _
    $region29: #{tpu_custom_call.1} parent=1 // pred_fallthru
      _
    // Predicated region
    $region30: #{tpu_custom_call.1} parent=1 // pred_check
      _
    $region31: #{tpu_custom_call.1} parent=1 // pred_check_branch
      %38 = sbr.rel (0) target = $region33
    $region32: #{tpu_custom_call.1} parent=1 // pred_region
      %39 = dma.done [#allocation3], 4096
    $region33: #{tpu_custom_call.1} parent=1 // pred_fallthru
      _
    %v41 = vld [vmem:[%s0] sm:$0xf]
    %v42 = vld [vmem:[%s0 + $0x4] sm:$0xf]
    %v43 = vld [vmem:[%s1] sm:$0xff]
    %v44 = vld [vmem:[%s1 + $0x8] sm:$0xff]
    %v45 = vld [vmem:[%s1 + $0x10] sm:$0xff]
    %v46 = vld [vmem:[%s1 + $0x18] sm:$0xff]
    %v47 = vld [vmem:[%s2] sm:$0x3]
    %v49 = vlaneseq
    %v50 = vshrl.u32 %v49, 7
    %v51 = vsub.s32 0, %v50
    %v52 = vrot.slane %v47, %v51
    %v53 = vlaneseq
    %v54 = vshrl.u32 %v53, 7
    %v55 = vsub.s32 1, %v54
    %v56 = vrot.slane %v47, %v55
    %v61 = vunpack.c.l.b16 %v41
    %v62 = vunpack.c.l.b16 %v42
    %v63 = vpack.c.b16 %v62, %v61
    %v68 = vunpack.c.l.b16 %v43
    %v69 = vunpack.c.h.b16 %v43
    %v70 = vunpack.c.l.b16 %v44
    %v71 = vunpack.c.h.b16 %v44
    %v72 = vunpack.c.l.b16 %v45
    %v73 = vunpack.c.h.b16 %v45
    %v74 = vunpack.c.l.b16 %v46
    %v75 = vunpack.c.h.b16 %v46
    %v76 = vpack.c.b16 %v70, %v68
    %v77 = vpack.c.b16 %v71, %v69
    %v78 = vpack.c.b16 %v74, %v72
    %v79 = vpack.c.b16 %v75, %v73
    %vm84 = vcmask 261120
    %v86 = vsel %vm84, %v63, 0
    %88 = vmatprep.subr.bf16.mxu0 %v77
    %89 = vmatpush1.bf16.msra.mxu0 %v76
    %90 = vmatprep.subr.bf16.mxu0 %v79
    %91 = vmatpush1.bf16.msra.mxu0 %v78
    %92 = vmatprep.subr.bf16.mxu0 0
    %93 = vmatpush1.bf16.msra.mxu0 0
    %94 = vmatprep.subr.bf16.mxu0 0
    %95 = vmatpush1.bf16.msra.mxu0 0
    %96 = vmatprep.subr.bf16.mxu0 0
    %97 = vmatpush1.bf16.msra.mxu0 0
    %98 = vmatprep.subr.bf16.mxu0 0
    %99 = vmatpush1.bf16.msra.mxu0 0
    %100 = vmatprep.subr.bf16.mxu0 0
    %101 = vmatpush1.bf16.msra.mxu0 0
    %102 = vmatprep.subr.bf16.mxu0 0
    %103 = vmatpush1.bf16.msra.mxu0 0
    %104 = vmatprep.subr.bf16.mxu0 0
    %105 = vmatpush1.bf16.msra.mxu0 0
    %106 = vmatprep.subr.bf16.mxu0 0
    %107 = vmatpush1.bf16.msra.mxu0 0
    %108 = vmatprep.subr.bf16.mxu0 0
    %109 = vmatpush1.bf16.msra.mxu0 0
    %110 = vmatprep.subr.bf16.mxu0 0
    %111 = vmatpush1.bf16.msra.mxu0 0
    %112 = vmatprep.subr.bf16.mxu0 0
    %113 = vmatpush1.bf16.msra.mxu0 0
    %114 = vmatprep.subr.bf16.mxu0 0
    %115 = vmatpush1.bf16.msra.mxu0 0
    %116 = vmatprep.subr.bf16.mxu0 0
    %117 = vmatpush1.bf16.msra.mxu0 0
    %118 = vmatprep.subr.bf16.mxu0 0
    %119 = vmatpush1.bf16.msra.mxu0 0
    %120 = vmatprep.mubr.bf16.mxu0 0
    %121 = vmatmul.mubr.bf16.gmra.mrb[0].mxu0 %v86
    %v122 = vpop.f32.mrb[0].mxu0
    %v123 = vadd.f32 %v52, %v122
    %v124 = vpop.f32.mrb[0].mxu0
    %v125 = vadd.f32 %v56, %v124
    %v126 = vpop.f32.mrb[0].mxu0
    %v127 = vadd.f32 %v52, %v126
    %v128 = vpop.f32.mrb[0].mxu0
    %v129 = vadd.f32 %v56, %v128
    %130 = vdwg.mxu0
    %v131 = vmax.f32 %v123, 0.0
    %v132 = vmax.f32 %v125, 0.0
    %v133 = vmax.f32 %v127, 0.0
    %v134 = vmax.f32 %v129, 0.0
    %v135 = vpack.c.bf16 %v133, %v131
    %v136 = vpack.c.bf16 %v134, %v132
    %v137 = vld [vmem:[#allocation2] sm:$0xff]
    %v138 = vld [vmem:[#allocation2 + $0x8] sm:$0xff]
    %v139 = vld [vmem:[#allocation2 + $0x10] sm:$0xff]
    %v140 = vld [vmem:[#allocation2 + $0x18] sm:$0xff]
    %v141 = vld [vmem:[#allocation2 + $0x20] sm:$0xff]
    %v142 = vld [vmem:[#allocation2 + $0x28] sm:$0xff]
    %v143 = vld [vmem:[#allocation2 + $0x30] sm:$0xff]
    %v144 = vld [vmem:[#allocation2 + $0x38] sm:$0xff]
    %v145 = vld [vmem:[#allocation2 + $0x40] sm:$0xff]
    %v146 = vld [vmem:[#allocation2 + $0x48] sm:$0xff]
    %v147 = vld [vmem:[#allocation2 + $0x50] sm:$0xff]
    %v148 = vld [vmem:[#allocation2 + $0x58] sm:$0xff]
    %v149 = vld [vmem:[#allocation2 + $0x60] sm:$0xff]
    %v150 = vld [vmem:[#allocation2 + $0x68] sm:$0xff]
    %v151 = vld [vmem:[#allocation2 + $0x70] sm:$0xff]
    %v152 = vld [vmem:[#allocation2 + $0x78] sm:$0xff]
    %v153 = vld [vmem:[#allocation2 + $0x80] sm:$0xff]
    %v154 = vld [vmem:[#allocation2 + $0x88] sm:$0xff]
    %v155 = vld [vmem:[#allocation2 + $0x90] sm:$0xff]
    %v156 = vld [vmem:[#allocation2 + $0x98] sm:$0xff]
    %v157 = vld [vmem:[#allocation2 + $0xa0] sm:$0xff]
    %v158 = vld [vmem:[#allocation2 + $0xa8] sm:$0xff]
    %v159 = vld [vmem:[#allocation2 + $0xb0] sm:$0xff]
    %v160 = vld [vmem:[#allocation2 + $0xb8] sm:$0xff]
    %v161 = vld [vmem:[#allocation2 + $0xc0] sm:$0xff]
    %v162 = vld [vmem:[#allocation2 + $0xc8] sm:$0xff]
    %v163 = vld [vmem:[#allocation2 + $0xd0] sm:$0xff]
    %v164 = vld [vmem:[#allocation2 + $0xd8] sm:$0xff]
    %v165 = vld [vmem:[#allocation2 + $0xe0] sm:$0xff]
    %v166 = vld [vmem:[#allocation2 + $0xe8] sm:$0xff]
    %v167 = vld [vmem:[#allocation2 + $0xf0] sm:$0xff]
    %v168 = vld [vmem:[#allocation2 + $0xf8] sm:$0xff]
    %v169 = vld [vmem:[%s4] sm:$0x3]
    %v171 = vlaneseq
    %v172 = vshrl.u32 %v171, 7
    %v173 = vsub.s32 0, %v172
    %v174 = vrot.slane %v169, %v173
    %v175 = vlaneseq
    %v176 = vshrl.u32 %v175, 7
    %v177 = vsub.s32 1, %v176
    %v178 = vrot.slane %v169, %v177
    %v213 = vunpack.c.l.b16 %v137
    %v214 = vunpack.c.h.b16 %v137
    %v215 = vunpack.c.l.b16 %v138
    %v216 = vunpack.c.h.b16 %v138
    %v217 = vunpack.c.l.b16 %v139
    %v218 = vunpack.c.h.b16 %v139
    %v219 = vunpack.c.l.b16 %v140
    %v220 = vunpack.c.h.b16 %v140
    %v221 = vunpack.c.l.b16 %v141
    %v222 = vunpack.c.h.b16 %v141
    %v223 = vunpack.c.l.b16 %v142
    %v224 = vunpack.c.h.b16 %v142
    %v225 = vunpack.c.l.b16 %v143
    %v226 = vunpack.c.h.b16 %v143
    %v227 = vunpack.c.l.b16 %v144
    %v228 = vunpack.c.h.b16 %v144
    %v229 = vunpack.c.l.b16 %v145
    %v230 = vunpack.c.h.b16 %v145
    %v231 = vunpack.c.l.b16 %v146
    %v232 = vunpack.c.h.b16 %v146
    %v233 = vunpack.c.l.b16 %v147
    %v234 = vunpack.c.h.b16 %v147
    %v235 = vunpack.c.l.b16 %v148
    %v236 = vunpack.c.h.b16 %v148
    %v237 = vunpack.c.l.b16 %v149
    %v238 = vunpack.c.h.b16 %v149
    %v239 = vunpack.c.l.b16 %v150
    %v240 = vunpack.c.h.b16 %v150
    %v241 = vunpack.c.l.b16 %v151
    %v242 = vunpack.c.h.b16 %v151
    %v243 = vunpack.c.l.b16 %v152
    %v244 = vunpack.c.h.b16 %v152
    %v245 = vunpack.c.l.b16 %v153
    %v246 = vunpack.c.h.b16 %v153
    %v247 = vunpack.c.l.b16 %v154
    %v248 = vunpack.c.h.b16 %v154
    %v249 = vunpack.c.l.b16 %v155
    %v250 = vunpack.c.h.b16 %v155
    %v251 = vunpack.c.l.b16 %v156
    %v252 = vunpack.c.h.b16 %v156
    %v253 = vunpack.c.l.b16 %v157
    %v254 = vunpack.c.h.b16 %v157
    %v255 = vunpack.c.l.b16 %v158
    %v256 = vunpack.c.h.b16 %v158
    %v257 = vunpack.c.l.b16 %v159
    %v258 = vunpack.c.h.b16 %v159
    %v259 = vunpack.c.l.b16 %v160
    %v260 = vunpack.c.h.b16 %v160
    %v261 = vunpack.c.l.b16 %v161
    %v262 = vunpack.c.h.b16 %v161
    %v263 = vunpack.c.l.b16 %v162
    %v264 = vunpack.c.h.b16 %v162
    %v265 = vunpack.c.l.b16 %v163
    %v266 = vunpack.c.h.b16 %v163
    %v267 = vunpack.c.l.b16 %v164
    %v268 = vunpack.c.h.b16 %v164
    %v269 = vunpack.c.l.b16 %v165
    %v270 = vunpack.c.h.b16 %v165
    %v271 = vunpack.c.l.b16 %v166
    %v272 = vunpack.c.h.b16 %v166
    %v273 = vunpack.c.l.b16 %v167
    %v274 = vunpack.c.h.b16 %v167
    %v275 = vunpack.c.l.b16 %v168
    %v276 = vunpack.c.h.b16 %v168
    %v277 = vpack.c.b16 %v215, %v213
    %v278 = vpack.c.b16 %v216, %v214
    %v279 = vpack.c.b16 %v219, %v217
    %v280 = vpack.c.b16 %v220, %v218
    %v281 = vpack.c.b16 %v223, %v221
    %v282 = vpack.c.b16 %v224, %v222
    %v283 = vpack.c.b16 %v227, %v225
    %v284 = vpack.c.b16 %v228, %v226
    %v285 = vpack.c.b16 %v231, %v229
    %v286 = vpack.c.b16 %v232, %v230
    %v287 = vpack.c.b16 %v235, %v233
    %v288 = vpack.c.b16 %v236, %v234
    %v289 = vpack.c.b16 %v239, %v237
    %v290 = vpack.c.b16 %v240, %v238
    %v291 = vpack.c.b16 %v243, %v241
    %v292 = vpack.c.b16 %v244, %v242
    %v293 = vpack.c.b16 %v247, %v245
    %v294 = vpack.c.b16 %v248, %v246
    %v295 = vpack.c.b16 %v251, %v249
    %v296 = vpack.c.b16 %v252, %v250
    %v297 = vpack.c.b16 %v255, %v253
    %v298 = vpack.c.b16 %v256, %v254
    %v299 = vpack.c.b16 %v259, %v257
    %v300 = vpack.c.b16 %v260, %v258
    %v301 = vpack.c.b16 %v263, %v261
    %v302 = vpack.c.b16 %v264, %v262
    %v303 = vpack.c.b16 %v267, %v265
    %v304 = vpack.c.b16 %v268, %v266
    %v305 = vpack.c.b16 %v271, %v269
    %v306 = vpack.c.b16 %v272, %v270
    %v307 = vpack.c.b16 %v275, %v273
    %v308 = vpack.c.b16 %v276, %v274
    %341 = vmatprep.subr.bf16.mxu0 %v278
    %342 = vmatpush1.bf16.msra.mxu0 %v277
    %343 = vmatprep.subr.bf16.mxu0 %v280
    %344 = vmatpush1.bf16.msra.mxu0 %v279
    %345 = vmatprep.subr.bf16.mxu0 %v282
    %346 = vmatpush1.bf16.msra.mxu0 %v281
    %347 = vmatprep.subr.bf16.mxu0 %v284
    %348 = vmatpush1.bf16.msra.mxu0 %v283
    %349 = vmatprep.subr.bf16.mxu0 %v286
    %350 = vmatpush1.bf16.msra.mxu0 %v285
    %351 = vmatprep.subr.bf16.mxu0 %v288
    %352 = vmatpush1.bf16.msra.mxu0 %v287
    %353 = vmatprep.subr.bf16.mxu0 %v290
    %354 = vmatpush1.bf16.msra.mxu0 %v289
    %355 = vmatprep.subr.bf16.mxu0 %v292
    %356 = vmatpush1.bf16.msra.mxu0 %v291
    %357 = vmatprep.subr.bf16.mxu0 %v294
    %358 = vmatpush1.bf16.msra.mxu0 %v293
    %359 = vmatprep.subr.bf16.mxu0 %v296
    %360 = vmatpush1.bf16.msra.mxu0 %v295
    %361 = vmatprep.subr.bf16.mxu0 %v298
    %362 = vmatpush1.bf16.msra.mxu0 %v297
    %363 = vmatprep.subr.bf16.mxu0 %v300
    %364 = vmatpush1.bf16.msra.mxu0 %v299
    %365 = vmatprep.subr.bf16.mxu0 %v302
    %366 = vmatpush1.bf16.msra.mxu0 %v301
    %367 = vmatprep.subr.bf16.mxu0 %v304
    %368 = vmatpush1.bf16.msra.mxu0 %v303
    %369 = vmatprep.subr.bf16.mxu0 %v306
    %370 = vmatpush1.bf16.msra.mxu0 %v305
    %371 = vmatprep.subr.bf16.mxu0 %v308
    %372 = vmatpush1.bf16.msra.mxu0 %v307
    %373 = vmatprep.mubr.bf16.mxu0 %v136
    %374 = vmatmul.mubr.bf16.gmra.mrb[0].mxu0 %v135
    %v375 = vpop.f32.mrb[0].mxu0
    %v376 = vadd.f32 %v174, %v375
    %v377 = vpop.f32.mrb[0].mxu0
    %v378 = vadd.f32 %v178, %v377
    %v379 = vpop.f32.mrb[0].mxu0
    %v380 = vadd.f32 %v174, %v379
    %v381 = vpop.f32.mrb[0].mxu0
    %v382 = vadd.f32 %v178, %v381
    %383 = vdwg.mxu0
    %v384 = vmax.f32 %v376, 0.0
    %v385 = vmax.f32 %v378, 0.0
    %v386 = vmax.f32 %v380, 0.0
    %v387 = vmax.f32 %v382, 0.0
    %v388 = vpack.c.bf16 %v386, %v384
    %v389 = vpack.c.bf16 %v387, %v385
    %v390 = vld [vmem:[%s5] sm:$0xf]
    %v391 = vld [vmem:[%s5 + $0x4] sm:$0xf]
    %v392 = vld [vmem:[%s5 + $0x8] sm:$0xf]
    %v393 = vld [vmem:[%s5 + $0xc] sm:$0xf]
    %v394 = vld [vmem:[%s5 + $0x10] sm:$0xf]
    %v395 = vld [vmem:[%s5 + $0x14] sm:$0xf]
    %v396 = vld [vmem:[%s5 + $0x18] sm:$0xf]
    %v397 = vld [vmem:[%s5 + $0x1c] sm:$0xf]
    %v398 = vld [vmem:[%s5 + $0x20] sm:$0xf]
    %v399 = vld [vmem:[%s5 + $0x24] sm:$0xf]
    %v400 = vld [vmem:[%s5 + $0x28] sm:$0xf]
    %v401 = vld [vmem:[%s5 + $0x2c] sm:$0xf]
    %v402 = vld [vmem:[%s5 + $0x30] sm:$0xf]
    %v403 = vld [vmem:[%s5 + $0x34] sm:$0xf]
    %v404 = vld [vmem:[%s5 + $0x38] sm:$0xf]
    %v405 = vld [vmem:[%s5 + $0x3c] sm:$0xf]
    %v406 = vld [vmem:[%s5 + $0x40] sm:$0xf]
    %v407 = vld [vmem:[%s5 + $0x44] sm:$0xf]
    %v408 = vld [vmem:[%s5 + $0x48] sm:$0xf]
    %v409 = vld [vmem:[%s5 + $0x4c] sm:$0xf]
    %v410 = vld [vmem:[%s5 + $0x50] sm:$0xf]
    %v411 = vld [vmem:[%s5 + $0x54] sm:$0xf]
    %v412 = vld [vmem:[%s5 + $0x58] sm:$0xf]
    %v413 = vld [vmem:[%s5 + $0x5c] sm:$0xf]
    %v414 = vld [vmem:[%s5 + $0x60] sm:$0xf]
    %v415 = vld [vmem:[%s5 + $0x64] sm:$0xf]
    %v416 = vld [vmem:[%s5 + $0x68] sm:$0xf]
    %v417 = vld [vmem:[%s5 + $0x6c] sm:$0xf]
    %v418 = vld [vmem:[%s5 + $0x70] sm:$0xf]
    %v419 = vld [vmem:[%s5 + $0x74] sm:$0xf]
    %v420 = vld [vmem:[%s5 + $0x78] sm:$0xf]
    %v421 = vld [vmem:[%s5 + $0x7c] sm:$0xf]
    %v422 = vld [vmem:[%s6] sm:$0x1]
    %v424 = vlaneseq
    %v425 = vshrl.u32 %v424, 7
    %v426 = vsub.s32 0, %v425
    %v427 = vrot.slane %v422, %v426
    %v461 = vunpack.c.l.b16 %v390
    %v462 = vunpack.c.l.b16 %v391
    %v463 = vunpack.c.l.b16 %v392
    %v464 = vunpack.c.l.b16 %v393
    %v465 = vunpack.c.l.b16 %v394
    %v466 = vunpack.c.l.b16 %v395
    %v467 = vunpack.c.l.b16 %v396
    %v468 = vunpack.c.l.b16 %v397
    %v469 = vunpack.c.l.b16 %v398
    %v470 = vunpack.c.l.b16 %v399
    %v471 = vunpack.c.l.b16 %v400
    %v472 = vunpack.c.l.b16 %v401
    %v473 = vunpack.c.l.b16 %v402
    %v474 = vunpack.c.l.b16 %v403
    %v475 = vunpack.c.l.b16 %v404
    %v476 = vunpack.c.l.b16 %v405
    %v477 = vunpack.c.l.b16 %v406
    %v478 = vunpack.c.l.b16 %v407
    %v479 = vunpack.c.l.b16 %v408
    %v480 = vunpack.c.l.b16 %v409
    %v481 = vunpack.c.l.b16 %v410
    %v482 = vunpack.c.l.b16 %v411
    %v483 = vunpack.c.l.b16 %v412
    %v484 = vunpack.c.l.b16 %v413
    %v485 = vunpack.c.l.b16 %v414
    %v486 = vunpack.c.l.b16 %v415
    %v487 = vunpack.c.l.b16 %v416
    %v488 = vunpack.c.l.b16 %v417
    %v489 = vunpack.c.l.b16 %v418
    %v490 = vunpack.c.l.b16 %v419
    %v491 = vunpack.c.l.b16 %v420
    %v492 = vunpack.c.l.b16 %v421
    %v493 = vpack.c.b16 %v462, %v461
    %v494 = vpack.c.b16 %v464, %v463
    %v495 = vpack.c.b16 %v466, %v465
    %v496 = vpack.c.b16 %v468, %v467
    %v497 = vpack.c.b16 %v470, %v469
    %v498 = vpack.c.b16 %v472, %v471
    %v499 = vpack.c.b16 %v474, %v473
    %v500 = vpack.c.b16 %v476, %v475
    %v501 = vpack.c.b16 %v478, %v477
    %v502 = vpack.c.b16 %v480, %v479
    %v503 = vpack.c.b16 %v482, %v481
    %v504 = vpack.c.b16 %v484, %v483
    %v505 = vpack.c.b16 %v486, %v485
    %v506 = vpack.c.b16 %v488, %v487
    %v507 = vpack.c.b16 %v490, %v489
    %v508 = vpack.c.b16 %v492, %v491
    %525 = vmatprep.subr.bf16.mxu0 0
    %526 = vmatpush1.bf16.msra.mxu0 %v493
    %527 = vmatprep.subr.bf16.mxu0 0
    %528 = vmatpush1.bf16.msra.mxu0 %v494
    %529 = vmatprep.subr.bf16.mxu0 0
    %530 = vmatpush1.bf16.msra.mxu0 %v495
    %531 = vmatprep.subr.bf16.mxu0 0
    %532 = vmatpush1.bf16.msra.mxu0 %v496
    %533 = vmatprep.subr.bf16.mxu0 0
    %534 = vmatpush1.bf16.msra.mxu0 %v497
    %535 = vmatprep.subr.bf16.mxu0 0
    %536 = vmatpush1.bf16.msra.mxu0 %v498
    %537 = vmatprep.subr.bf16.mxu0 0
    %538 = vmatpush1.bf16.msra.mxu0 %v499
    %539 = vmatprep.subr.bf16.mxu0 0
    %540 = vmatpush1.bf16.msra.mxu0 %v500
    %541 = vmatprep.subr.bf16.mxu0 0
    %542 = vmatpush1.bf16.msra.mxu0 %v501
    %543 = vmatprep.subr.bf16.mxu0 0
    %544 = vmatpush1.bf16.msra.mxu0 %v502
    %545 = vmatprep.subr.bf16.mxu0 0
    %546 = vmatpush1.bf16.msra.mxu0 %v503
    %547 = vmatprep.subr.bf16.mxu0 0
    %548 = vmatpush1.bf16.msra.mxu0 %v504
    %549 = vmatprep.subr.bf16.mxu0 0
    %550 = vmatpush1.bf16.msra.mxu0 %v505
    %551 = vmatprep.subr.bf16.mxu0 0
    %552 = vmatpush1.bf16.msra.mxu0 %v506
    %553 = vmatprep.subr.bf16.mxu0 0
    %554 = vmatpush1.bf16.msra.mxu0 %v507
    %555 = vmatprep.subr.bf16.mxu0 0
    %556 = vmatpush1.bf16.msra.mxu0 %v508
    %557 = vmatprep.mubr.bf16.mxu0 %v389
    %558 = vmatmul.mubr.bf16.gmra.mrb[0].mxu0 %v388
    %v559 = vpop.f32.mrb[0].mxu0
    %v560 = vadd.f32 %v427, %v559
    %v561 = vpop.f32.mrb[0].mxu0
    %v562 = vpop.f32.mrb[0].mxu0
    %v563 = vadd.f32 %v427, %v562
    %v564 = vpop.f32.mrb[0].mxu0
    %565 = vdwg.mxu0
    %v566 = vtanh.pop %v560
    %v567 = vtanh.pop %v563
    %vm568 = vcmask 31744
    %569 = vst.msk [vmem:[%s7] sm:$0xff] %vm568, %v566
    %570 = vst.msk [vmem:[%s7 + $0x8] sm:$0xff] %vm568, %v567
    // Predicated region
    $region34: #{tpu_custom_call.1} parent=1 // pred_check
      _
    $region35: #{tpu_custom_call.1} parent=1 // pred_check_branch
      %572 = sbr.rel (0) target = $region37
    $region36: #{tpu_custom_call.1} parent=1 // pred_region
      _
    $region37: #{tpu_custom_call.1} parent=1 // pred_fallthru
      _
    // Predicated region
    $region38: #{tpu_custom_call.1} parent=1 // pred_check
      _
    $region39: #{tpu_custom_call.1} parent=1 // pred_check_branch
      %574 = sbr.rel (0) target = $region41
    $region40: #{tpu_custom_call.1} parent=1 // pred_region
      _
    $region41: #{tpu_custom_call.1} parent=1 // pred_fallthru
      _
    %575 = vsyncpa [#allocation3], 1

</llo_original>
